<compile_context>
chip_gen: v7x
topology: tpu7x:2x2x1
jax: 0.10.0
libtpu: 0.0.40
codegen_flags: <defaults>
</compile_context>

<pallas_src>
import jax
import jax.numpy as jnp
from jax.experimental import pallas as pl
from jax.experimental.pallas import tpu as pltpu


def _pos_embed_kernel(w_pos_ref, out_ref):
    # w_pos_ref: (seq, d_model) VMEM tile — positional embeddings for rows 0..seq-1.
    # out_ref:   (BB, seq, d_model) output tile covering BB batch elements.
    out_ref[...] = jnp.broadcast_to(w_pos_ref[...][None, :, :], out_ref.shape)


def pos_embed(tokens: jax.Array, w_pos: jax.Array,
              *, out_tile_bytes: int = 6 * 1024 * 1024) -> jax.Array:
    """tokens: [batch, seq] int (only shape used), w_pos: [n_ctx, d_model]
    -> [batch, seq, d_model] = W_pos[:seq] broadcast over batch."""
    batch, seq = tokens.shape
    n_ctx, d_model = w_pos.shape
    assert seq <= n_ctx, "sequence longer than n_ctx"

    # Slice outside the kernel so the kernel's input block == full array
    # (avoids (8,128) tiling constraints for arbitrary seq).
    w_pos_seq = w_pos[:seq]

    itemsize = jnp.dtype(w_pos.dtype).itemsize
    tile_bytes = seq * d_model * itemsize

    # Batch-block size: make the (double-buffered) output tile a few MiB.
    bb = max(1, out_tile_bytes // max(tile_bytes, 1))
    bb = min(bb, batch)
    if batch >= 2:
        # Keep >= 2 grid steps so the "parallel" batch axis can be sharded
        # across both TensorCores on v7x (no-op on single-TC v5e/v6e).
        bb = min(bb, pl.cdiv(batch, 2))
    grid = (pl.cdiv(batch, bb),)

    # Explicit VMEM budget: 2 output buffers + 2 input buffers + slack,
    # capped at 48 MiB (fits v7x's 64 MiB physical VMEM with headroom).
    vmem_needed = 2 * bb * tile_bytes + 2 * tile_bytes + (4 << 20)
    vmem_limit = int(min(48 << 20, max(vmem_needed, 16 << 20)))

    return pl.pallas_call(
        _pos_embed_kernel,
        out_shape=jax.ShapeDtypeStruct((batch, seq, d_model), w_pos.dtype),
        grid_spec=pltpu.PrefetchScalarGridSpec(
            num_scalar_prefetch=0,
            grid=grid,
            in_specs=[
                # Full W_pos[:seq] block, identical for every grid step
                # (stays resident in VMEM; only re-DMA'd if the pipeline
                # decides to, which is cheap vs. the output traffic).
                pl.BlockSpec((seq, d_model), lambda b: (0, 0)),
            ],
            out_specs=pl.BlockSpec((bb, seq, d_model), lambda b: (b, 0, 0)),
        ),
        compiler_params=pltpu.CompilerParams(
            dimension_semantics=("parallel",),
            vmem_limit_bytes=vmem_limit,
        ),
    )(w_pos_seq)


def _reference(tokens, w_pos):
    batch, seq = tokens.shape
    d_model = w_pos.shape[1]
    return jnp.broadcast_to(w_pos[:seq][None, :, :], (batch, seq, d_model))


if __name__ == "__main__":
    init_range = 0.02
    key = jax.random.PRNGKey(0)
    k_w, k_tok, k_w2, k_tok2 = jax.random.split(key, 4)

    # Case 1: small, lane-dense config (d_model multiple of 128, as in real
    # GPT-2 where d_model=768).
    batch, seq, n_ctx, d_model = 4, 8, 64, 128
    w_pos = init_range * jax.random.normal(k_w, (n_ctx, d_model), dtype=jnp.float32)
    tokens = jax.random.randint(k_tok, (batch, seq), 0, 1000, dtype=jnp.int32)

    out = jax.block_until_ready(pos_embed(tokens, w_pos))
    ref = _reference(tokens, w_pos)
    assert out.shape == (batch, seq, d_model)
    assert out.dtype == jnp.float32
    assert jnp.allclose(out, ref), "mismatch vs reference (case 1)"

    # Case 2: awkward shapes (seq not a multiple of 8, ragged batch blocking)
    # to exercise the full-array input block path.
    batch2, seq2, n_ctx2, d_model2 = 3, 5, 16, 128
    w_pos2 = init_range * jax.random.normal(k_w2, (n_ctx2, d_model2), dtype=jnp.float32)
    tokens2 = jax.random.randint(k_tok2, (batch2, seq2), 0, 1000, dtype=jnp.int32)

    out2 = jax.block_until_ready(pos_embed(tokens2, w_pos2))
    ref2 = _reference(tokens2, w_pos2)
    assert out2.shape == (batch2, seq2, d_model2)
    assert jnp.allclose(out2, ref2), "mismatch vs reference (case 2)"

    print("KERNEL_OK")
</pallas_src>

<mosaic_0001>
module attributes {stable_mosaic.version = 11 : i64} {
  func.func @_pos_embed_kernel(%arg0: i32, %arg1: memref<8x128xf32, #tpu.memory_space<vmem>>, %arg2: memref<2x8x128xf32, #tpu.memory_space<vmem>>) attributes {dimension_semantics = [#tpu.dimension_semantics<parallel>], iteration_bounds = array<i64: 2>, scalar_prefetch = 0 : i64, scratch_operands = 0 : i64, tpu.core_type = #tpu.core_type<tc>, window_params = [{pipeline_mode = #tpu.pipeline_mode<synchronous>, transform_indices = @transform_0, window_bounds = array<i64: 8, 128>}, {transform_indices = @transform_1, window_bounds = array<i64: 2, 8, 128>}]} {
    %c0 = arith.constant 0 : index
    %c0_0 = arith.constant 0 : index
    %0 = vector.load %arg1[%c0, %c0_0] : memref<8x128xf32, #tpu.memory_space<vmem>>, vector<8x128xf32>
    %1 = vector.shape_cast %0 : vector<8x128xf32> to vector<1x8x128xf32>
    %2 = vector.shape_cast %1 : vector<1x8x128xf32> to vector<1x8x128xf32>
    %3 = vector.broadcast %2 : vector<1x8x128xf32> to vector<2x8x128xf32>
    %c0_1 = arith.constant 0 : index
    %c0_2 = arith.constant 0 : index
    %c0_3 = arith.constant 0 : index
    %4 = vector.load %arg2[%c0_1, %c0_2, %c0_3] : memref<2x8x128xf32, #tpu.memory_space<vmem>>, vector<2x8x128xf32>
    tpu.vector_store %arg2[%c0_1, %c0_2, %c0_3], %3 {strides = array<i32>} : memref<2x8x128xf32, #tpu.memory_space<vmem>>, vector<2x8x128xf32>,
    return
  }
  func.func @transform_0(%arg0: i32) -> (i32, i32) {
    %c0_i32 = arith.constant 0 : i32
    %c0_i32_0 = arith.constant 0 : i32
    %c0_i32_1 = arith.constant 0 : i32
    return %c0_i32, %c0_i32_0 : i32, i32
  }
  func.func @transform_1(%arg0: i32) -> (i32, i32, i32) {
    %c0_i32 = arith.constant 0 : i32
    %c0_i32_0 = arith.constant 0 : i32
    %c0_i32_1 = arith.constant 0 : i32
    return %arg0, %c0_i32, %c0_i32_0 : i32, i32, i32
  }
}

</mosaic_0001>

<llo_original>
// kernel: tpu_custom_call.1
$region0: #{tpu_custom_call.1}
  #allocation0 [shape = 'u32[]', space=smem, size = 0x4, offset = 0x4, fixed_abs, tag = 'smem constant byte address 0x4 - core index']
  #allocation1 [shape = 'u32[144,128]{1,0:T(1,128)}', space=vmem, size = 0x12000, scoped, tag = 'internal scratch']
  %s0 = inlined_call_operand.hbm [shape: f32[8,128], index: 0, kind: input, shape index: {}]
  %s1 = inlined_call_operand.hbm [shape: f32[4,8,128], index: 1, kind: output, shape index: {}]
  %s2 = sld [smem:[#allocation0]]
  $region41: #{tpu_custom_call.1} parent=0
    _
  %s4 = ssub.s32 1, %s2
  %s5 = scalar_select 0, %s4, %s2
  $region1: #{tpu_custom_call.1} parent=0
    #allocation2 [shape = 'u8[4096]{0}', space=vmem, size = 0x1000, scoped, tag = 'input window, operand 0, single buffered']
    #allocation3 [shape = 's32[2]{0}', space=sflag, size = 0x8, scoped, tag = 'scoped memory for tpu_custom_call.1']
    #allocation4 [shape = 's32[2]{0}', space=sflag, size = 0x8, scoped, tag = 'scoped memory for tpu_custom_call.1']
    #allocation5 [shape = 'u8[16384]{0}', space=vmem, size = 0x4000, scoped, tag = 'output window, operand 0']
    %6 = vsyncpa [#allocation3], 0
    %7 = vsyncpa [#allocation4], 0
    %s8 = scalar_lea.sflag [#allocation4], 1
    %9 = vsyncpa %s8, 0
    loop: start=0, step=1, limit=4
    $region2: #{tpu_custom_call.1} parent=1 // loop_pre_header
      _
    $region3: #{tpu_custom_call.1} parent=1 // loop_header
      %s11 = sphi 0, %s15
      %p12 = scmp.ge.s32.totalorder %s11, 4
      %s19 = sphi 0, %s19
      %s21 = sphi 0, %s19
      %s22 = sphi 0, %s21
      %s36 = sphi 0, %s22
      %s42 = sphi 0, %s44
      %s45 = sphi 0, %s42
      %s46 = sphi 0, %s45
      %s62 = sphi 0, %s46
    $region4: #{tpu_custom_call.1} parent=1 // loop_header_branch
      %14 = sbr.rel (%p12) target = $region8
    $region5: #{tpu_custom_call.1} parent=1 // loop_body
      %s16 = ssub.s32 %s11, 1
      %s17 = ssub.s32 %s11, 2
      %s18 = sadd.s32 %s11, 1
      %s20 = sadd.s32 %s19, 1
      %p23 = scmp.eq.s32.totalorder %s11, 1
      %p24 = scmp.ne.s32.totalorder %s19, %s21
      %p25 = scmp.eq.s32.totalorder %s11, 0
      %p26 = por %p24, %p25
      %p27 = scmp.ne.s32.totalorder %s19, %s21
      %p28 = scmp.eq.s32.totalorder %s16, 1
      %p29 = por %p27, %p28
      %p30 = scmp.ne.s32.totalorder %s21, %s22
      %p31 = scmp.eq.s32.totalorder %s16, 0
      %p32 = por %p30, %p31
      %p33 = scmp.ne.s32.totalorder %s21, %s22
      %p34 = scmp.eq.s32.totalorder %s17, 1
      %p35 = por %p33, %p34
      %p37 = scmp.ne.s32.totalorder %s22, %s36
      %p38 = scmp.eq.s32.totalorder %s17, 0
      %p39 = por %p37, %p38
      %s40 = ssub.s32 %s11, %s18
      %p41 = scmp.eq.s32.totalorder %s40, 0
      %s43 = sadd.s32 %s42, 1
      %s44 = scalar_select %p41, %s42, %s43
      %p47 = pneg %p41
      %p48 = scmp.eq.s32.totalorder %s11, 1
      %p49 = por %p47, %p48
      %p50 = scmp.ne.s32.totalorder %s42, %s45
      %p51 = scmp.eq.s32.totalorder %s11, 0
      %p52 = por %p50, %p51
      %p53 = scmp.ne.s32.totalorder %s42, %s45
      %p54 = scmp.eq.s32.totalorder %s16, 1
      %p55 = por %p53, %p54
      %p56 = scmp.ne.s32.totalorder %s45, %s46
      %p57 = scmp.eq.s32.totalorder %s16, 0
      %p58 = por %p56, %p57
      %p59 = scmp.ne.s32.totalorder %s45, %s46
      %p60 = scmp.eq.s32.totalorder %s17, 1
      %p61 = por %p59, %p60
      %p63 = scmp.ne.s32.totalorder %s46, %s62
      %p64 = scmp.eq.s32.totalorder %s17, 0
      %p65 = por %p63, %p64
      %p66 = scmp.le.s32.totalorder 1, %s11
      %p67 = scmp.lt.s32.totalorder %s11, 3
      %p68 = pnand %p66, %p67
      %p69 = pneg %p68
      // Predicated region
      $region9: #{tpu_custom_call.1} parent=5 // pred_check
        _
      $region10: #{tpu_custom_call.1} parent=5 // pred_check_branch
        %71 = sbr.rel (%p68) target = $region12
      $region11: #{tpu_custom_call.1} parent=5 // pred_region
        %s72 = ssub.s32 %s11, 1
        // Predicated region
        $region13: #{tpu_custom_call.1} parent=11 // pred_check
          %p73 = pneg %p32
        $region14: #{tpu_custom_call.1} parent=11 // pred_check_branch
          %75 = sbr.rel (%p73) target = $region16
        $region15: #{tpu_custom_call.1} parent=11 // pred_region
          %s77 = ssub.s32 128, 128
          %78 = vsyncadd [#allocation3], %s77
          %s80 = sshll.u32 [#allocation2], 4
          %s81 = int_to_ptr.vmem [resolvable:$true] %s80
          %83 = dma.hbm_to_vmem [thread:$0]  %s0, 128, %s81, [#allocation3]
        $region16: #{tpu_custom_call.1} parent=11 // pred_fallthru
          _
      $region12: #{tpu_custom_call.1} parent=5 // pred_fallthru
        _
      %p84 = scmp.lt.s32.totalorder %s11, 2
      // Predicated region
      $region17: #{tpu_custom_call.1} parent=5 // pred_check
        %p85 = pneg %p84
      $region18: #{tpu_custom_call.1} parent=5 // pred_check_branch
        %87 = sbr.rel (%p85) target = $region20
      $region19: #{tpu_custom_call.1} parent=5 // pred_region
        _
      $region20: #{tpu_custom_call.1} parent=5 // pred_fallthru
        _
      %p88 = scmp.le.s32.totalorder 1, %s11
      %p89 = scmp.lt.s32.totalorder %s11, 3
      %p90 = pnand %p88, %p89
      %p91 = pneg %p90
      // Predicated region
      $region21: #{tpu_custom_call.1} parent=5 // pred_check
        _
      $region22: #{tpu_custom_call.1} parent=5 // pred_check_branch
        %93 = sbr.rel (%p90) target = $region24
      $region23: #{tpu_custom_call.1} parent=5 // pred_region
        %s94 = ssub.s32 %s11, 1
        // Predicated region
        $region25: #{tpu_custom_call.1} parent=23 // pred_check
          %p95 = pneg %p32
        $region26: #{tpu_custom_call.1} parent=23 // pred_check_branch
          %97 = sbr.rel (%p95) target = $region28
        $region27: #{tpu_custom_call.1} parent=23 // pred_region
          %98 = dma.done [#allocation3], 128
        $region28: #{tpu_custom_call.1} parent=23 // pred_fallthru
          _
        %p99 = pneg %p32
        %p100 = pneg %p29
        %p101 = pneg %p58
        %p102 = pneg %p55
        %s103 = sand.u32 %s45, 1
        %s104 = scalar_lea.sflag [#allocation4], %s103
        %s105 = sand.u32 %s45, 1
        %s106 = smul.addr %s105, 16
        %s107 = scalar_lea.vmem [#allocation5], %s106
        %s108 = smul.u32 2, %s16
        %v109 = vld [vmem:[#allocation2] sm:$0xff]
        %110 = vst [vmem:[%s107] sm:$0xff] %v109
        %111 = vst [vmem:[%s107 + $0x8] sm:$0xff] %v109
        %s112 = sand.u32 %s45, 1
        %s113 = scalar_lea.sflag [#allocation4], %s112
        %s114 = sand.u32 %s45, 1
        %s115 = smul.addr %s114, 16
        %s116 = scalar_lea.vmem [#allocation5], %s115
        // Predicated region
        $region29: #{tpu_custom_call.1} parent=23 // pred_check
          %p117 = pneg %p55
        $region30: #{tpu_custom_call.1} parent=23 // pred_check_branch
          %119 = sbr.rel (%p117) target = $region32
        $region31: #{tpu_custom_call.1} parent=23 // pred_region
          %s120 = smul.u32 2, %s16
          %s122 = ssub.s32 256, 256
          %123 = vsyncadd %s113, %s122
          %s124 = smul.addr %s120, 128
          %s125 = scalar_lea.hbm %s1, %s124
          %s126 = sshll.u32 %s116, 4
          %s127 = int_to_ptr.vmem [resolvable:$true] %s126
          %132 = dma.vmem_to_hbm [thread:$0]  %s127, 256, %s125, %s113, 128, 128, 8
        $region32: #{tpu_custom_call.1} parent=23 // pred_fallthru
          _
      $region24: #{tpu_custom_call.1} parent=5 // pred_fallthru
        _
      %p133 = scmp.le.s32.totalorder 2, %s11
      // Predicated region
      $region33: #{tpu_custom_call.1} parent=5 // pred_check
        %p134 = pneg %p133
      $region34: #{tpu_custom_call.1} parent=5 // pred_check_branch
        %136 = sbr.rel (%p134) target = $region36
      $region35: #{tpu_custom_call.1} parent=5 // pred_region
        %s137 = ssub.s32 %s11, 2
        // Predicated region
        $region37: #{tpu_custom_call.1} parent=35 // pred_check
          %p138 = pneg %p61
        $region38: #{tpu_custom_call.1} parent=35 // pred_check_branch
          %140 = sbr.rel (%p138) target = $region40
        $region39: #{tpu_custom_call.1} parent=35 // pred_region
          %s141 = sand.u32 %s46, 1
          %s142 = scalar_lea.sflag [#allocation4], %s141
          %s143 = sand.u32 %s46, 1
          %s144 = smul.addr %s143, 16
          %s145 = scalar_lea.vmem [#allocation5], %s144
          %146 = dma.done %s142, 256
        $region40: #{tpu_custom_call.1} parent=35 // pred_fallthru
          _
      $region36: #{tpu_custom_call.1} parent=5 // pred_fallthru
        _
    $region6: #{tpu_custom_call.1} parent=1 // loop_footer
      %s15 = sadd.s32 1, %s11
    $region7: #{tpu_custom_call.1} parent=1 // loop_footer_branch
      %10 = sbr.rel target = $region3
    $region8: #{tpu_custom_call.1} parent=1 // loop_exit
      _
    %147 = vsyncpa [#allocation3], 1
    %s148 = scalar_lea.sflag [#allocation3], 1
    %149 = vsyncpa %s148, 1
    %150 = vsyncpa [#allocation4], 1
    %s151 = scalar_lea.sflag [#allocation4], 1
    %152 = vsyncpa %s151, 1

</llo_original>
